<compile_context>
chip_gen: v6e
topology: v6e:2x2x1
jax: 0.10.0
libtpu: 0.0.40
codegen_flags: <defaults>
</compile_context>

<pallas_src>
import jax
import jax.numpy as jnp
from jax import lax
from jax.experimental import pallas as pl
from jax.experimental.pallas import tpu as pltpu

_NEG_PAD = -1e30  # pad-class bias: exp(_NEG_PAD - m) underflows to exactly 0


def vggish_mlp_kernel(x_ref, w1_ref, b1_ref, w2_ref, b2_ref, o_ref):
    # x: [TILE_B, 128], w1: [128, H], b1: [1, H],
    # w2: [H, N_PAD], b2: [1, N_PAD], o: [TILE_B, n_classes]
    n_classes = o_ref.shape[-1]
    x = x_ref[...]

    # Linear(128 -> H) + ReLU (MXU, exact f32)
    h = jnp.dot(x, w1_ref[...],
                preferred_element_type=jnp.float32,
                precision=lax.Precision.HIGHEST) + b1_ref[...]
    h = jnp.maximum(h, 0.0)

    # Linear(H -> N_PAD). Padded columns carry bias -1e30 -> zero softmax mass.
    logits = jnp.dot(h, w2_ref[...],
                     preferred_element_type=jnp.float32,
                     precision=lax.Precision.HIGHEST) + b2_ref[...]

    # Numerically stable softmax over last axis (== PyTorch dim=1 for [B, C]).
    m = jnp.max(logits, axis=-1, keepdims=True)
    e = jnp.exp(logits - m)
    denom = jnp.sum(e, axis=-1, keepdims=True)
    sm = e / denom  # exact division; approx reciprocal risked the 1e-5 tolerance

    # Store only the real classes (lane-masked narrow store; negligible vs saved bytes).
    o_ref[...] = sm[:, :n_classes].astype(o_ref.dtype)


def small_sound_vggish(x, w1, b1, w2, b2, *, tile_b=2048):
    """x: [B, 128]; w1: [128, H]; b1: [1, H]; w2: [H, C]; b2: [1, C]. Returns [B, C] f32."""
    B, in_features = x.shape
    hidden, n_classes = w2.shape

    # Lane-dense class dim for the in-VMEM softmax only (output is stored unpadded).
    n_pad = ((n_classes + 127) // 128) * 128
    w2p = jnp.pad(w2, ((0, 0), (0, n_pad - n_classes)))
    b2p = jnp.pad(b2, ((0, 0), (0, n_pad - n_classes)), constant_values=_NEG_PAD)

    # Pad batch only up to a multiple of 8 sublanes (no-op if already aligned);
    # the last (possibly partial) tile is handled by Pallas partial-block masking.
    b8 = ((B + 7) // 8) * 8
    if b8 != B:
        x = jnp.pad(x, ((0, b8 - B), (0, 0)))

    tile_b = max(8, min(((tile_b + 7) // 8) * 8, b8))
    grid = (pl.cdiv(b8, tile_b),)

    itemsize = jnp.dtype(x.dtype).itemsize
    cost = pl.CostEstimate(
        flops=2 * b8 * in_features * hidden + 2 * b8 * hidden * n_pad,
        transcendentals=b8 * n_pad,
        bytes_accessed=(
            b8 * in_features * itemsize                 # x read (dominant stream)
            + b8 * n_classes * 4                        # unpadded output write
            + (w1.size + b1.size + w2p.size + b2p.size) * 4
        ),
    )

    out = pl.pallas_call(
        vggish_mlp_kernel,
        out_shape=jax.ShapeDtypeStruct((b8, n_classes), jnp.float32),
        grid=grid,
        in_specs=[
            pl.BlockSpec((tile_b, in_features), lambda i: (i, 0)),   # x: streamed per step
            pl.BlockSpec((in_features, hidden), lambda i: (0, 0)),   # w1: VMEM-resident
            pl.BlockSpec((1, hidden), lambda i: (0, 0)),             # b1: VMEM-resident
            pl.BlockSpec((hidden, n_pad), lambda i: (0, 0)),         # w2 (padded): resident
            pl.BlockSpec((1, n_pad), lambda i: (0, 0)),              # b2 (padded): resident
        ],
        out_specs=pl.BlockSpec((tile_b, n_classes), lambda i: (i, 0)),
        compiler_params=pltpu.CompilerParams(dimension_semantics=("parallel",)),
        cost_estimate=cost,
    )(x, w1, b1, w2p, b2p)

    return out[:B]


def init_params(key, in_features=128, hidden=10, n_classes=10):
    # Deterministic init mimicking nn.Linear's U(-1/sqrt(fan_in), 1/sqrt(fan_in)).
    k1, k2, k3, k4 = jax.random.split(key, 4)
    bound1 = 1.0 / jnp.sqrt(jnp.float32(in_features))
    bound2 = 1.0 / jnp.sqrt(jnp.float32(hidden))
    # Stored as [in, out] (transposed relative to PyTorch's [out, in]).
    w1 = jax.random.uniform(k1, (in_features, hidden), jnp.float32, -bound1, bound1)
    b1 = jax.random.uniform(k2, (1, hidden), jnp.float32, -bound1, bound1)
    w2 = jax.random.uniform(k3, (hidden, n_classes), jnp.float32, -bound2, bound2)
    b2 = jax.random.uniform(k4, (1, n_classes), jnp.float32, -bound2, bound2)
    return w1, b1, w2, b2


def reference(x, w1, b1, w2, b2):
    h = jnp.maximum(jnp.dot(x, w1, precision=lax.Precision.HIGHEST) + b1, 0.0)
    logits = jnp.dot(h, w2, precision=lax.Precision.HIGHEST) + b2
    return jax.nn.softmax(logits, axis=1)


if __name__ == "__main__":
    key = jax.random.PRNGKey(0)
    kx, kp = jax.random.split(key)

    B, IN, HID, NC = 8, 128, 10, 10
    x = jax.random.normal(kx, (B, IN), jnp.float32)
    w1, b1, w2, b2 = init_params(kp, IN, HID, NC)

    out = small_sound_vggish(x, w1, b1, w2, b2)
    out = jax.block_until_ready(out)

    ref = reference(x, w1, b1, w2, b2)
    assert out.shape == (B, NC)
    assert jnp.allclose(out, ref, atol=1e-5, rtol=1e-5)
    assert jnp.allclose(jnp.sum(out, axis=1), jnp.ones((B,)), atol=1e-5)

    print("KERNEL_OK")
</pallas_src>

<mosaic_0001>
module attributes {stable_mosaic.version = 11 : i64} {
  func.func @vggish_mlp_kernel(%arg0: i32, %arg1: memref<8x128xf32, #tpu.memory_space<vmem>>, %arg2: memref<128x10xf32, #tpu.memory_space<vmem>>, %arg3: memref<1x10xf32, #tpu.memory_space<vmem>>, %arg4: memref<10x128xf32, #tpu.memory_space<vmem>>, %arg5: memref<1x128xf32, #tpu.memory_space<vmem>>, %arg6: memref<8x10xf32, #tpu.memory_space<vmem>>) attributes {dimension_semantics = [#tpu.dimension_semantics<parallel>], iteration_bounds = array<i64: 1>, scalar_prefetch = 0 : i64, scratch_operands = 0 : i64, tpu.core_type = #tpu.core_type<tc>, window_params = [{transform_indices = @transform_0, window_bounds = array<i64: 8, 128>}, {pipeline_mode = #tpu.pipeline_mode<synchronous>, transform_indices = @transform_1, window_bounds = array<i64: 128, 10>}, {pipeline_mode = #tpu.pipeline_mode<synchronous>, transform_indices = @transform_2, window_bounds = array<i64: 1, 10>}, {pipeline_mode = #tpu.pipeline_mode<synchronous>, transform_indices = @transform_3, window_bounds = array<i64: 10, 128>}, {pipeline_mode = #tpu.pipeline_mode<synchronous>, transform_indices = @transform_4, window_bounds = array<i64: 1, 128>}, {transform_indices = @transform_5, window_bounds = array<i64: 8, 10>}]} {
    %c0 = arith.constant 0 : index
    %c0_0 = arith.constant 0 : index
    %0 = vector.load %arg1[%c0, %c0_0] : memref<8x128xf32, #tpu.memory_space<vmem>>, vector<8x128xf32>
    %c0_1 = arith.constant 0 : index
    %c0_2 = arith.constant 0 : index
    %1 = vector.load %arg2[%c0_1, %c0_2] : memref<128x10xf32, #tpu.memory_space<vmem>>, vector<128x10xf32>
    %cst = arith.constant dense<0.000000e+00> : vector<8x10xf32>
    %2 = tpu.matmul %0, %1, %cst {dimension_numbers = #tpu.dot_dimension_numbers<[1], [0], [0], [1], [0, 0, 1, 1], [], []>, precision = #tpu.contract_precision<fp32>} : vector<8x128xf32>, vector<128x10xf32>, vector<8x10xf32> -> vector<8x10xf32>
    %c0_3 = arith.constant 0 : index
    %c0_4 = arith.constant 0 : index
    %3 = vector.load %arg3[%c0_3, %c0_4] : memref<1x10xf32, #tpu.memory_space<vmem>>, vector<1x10xf32>
    %4 = vector.broadcast %3 : vector<1x10xf32> to vector<8x10xf32>
    %5 = arith.addf %2, %4 : vector<8x10xf32>
    %cst_5 = arith.constant 0.000000e+00 : f32
    %6 = vector.broadcast %cst_5 : f32 to vector<8x10xf32>
    %7 = arith.maximumf %5, %6 : vector<8x10xf32>
    %c0_6 = arith.constant 0 : index
    %c0_7 = arith.constant 0 : index
    %8 = vector.load %arg4[%c0_6, %c0_7] : memref<10x128xf32, #tpu.memory_space<vmem>>, vector<10x128xf32>
    %cst_8 = arith.constant dense<0.000000e+00> : vector<8x128xf32>
    %9 = tpu.matmul %7, %8, %cst_8 {dimension_numbers = #tpu.dot_dimension_numbers<[1], [0], [0], [1], [0, 0, 1, 1], [], []>, precision = #tpu.contract_precision<fp32>} : vector<8x10xf32>, vector<10x128xf32>, vector<8x128xf32> -> vector<8x128xf32>
    %c0_9 = arith.constant 0 : index
    %c0_10 = arith.constant 0 : index
    %10 = vector.load %arg5[%c0_9, %c0_10] : memref<1x128xf32, #tpu.memory_space<vmem>>, vector<1x128xf32>
    %11 = vector.broadcast %10 : vector<1x128xf32> to vector<8x128xf32>
    %12 = arith.addf %9, %11 : vector<8x128xf32>
    %cst_11 = arith.constant dense<0xFF800000> : vector<8xf32>
    %13 = vector.multi_reduction <maximumf>, %12, %cst_11 [1] : vector<8x128xf32> to vector<8xf32>
    %14 = vector.shape_cast %13 : vector<8xf32> to vector<8x1xf32>
    %15 = vector.broadcast %14 : vector<8x1xf32> to vector<8x128xf32>
    %16 = arith.subf %12, %15 : vector<8x128xf32>
    %17 = math.exp %16 : vector<8x128xf32>
    %cst_12 = arith.constant dense<0.000000e+00> : vector<8xf32>
    %18 = vector.multi_reduction <add>, %17, %cst_12 [1] : vector<8x128xf32> to vector<8xf32>
    %19 = vector.shape_cast %18 : vector<8xf32> to vector<8x1xf32>
    %20 = vector.broadcast %19 : vector<8x1xf32> to vector<8x128xf32>
    %21 = arith.divf %17, %20 : vector<8x128xf32>
    %22 = vector.extract_strided_slice %21 {offsets = [0, 0], sizes = [8, 10], strides = [1, 1]} : vector<8x128xf32> to vector<8x10xf32>
    %c0_13 = arith.constant 0 : index
    %c0_14 = arith.constant 0 : index
    %23 = vector.load %arg6[%c0_13, %c0_14] : memref<8x10xf32, #tpu.memory_space<vmem>>, vector<8x10xf32>
    tpu.vector_store %arg6[%c0_13, %c0_14], %22 {strides = array<i32>} : memref<8x10xf32, #tpu.memory_space<vmem>>, vector<8x10xf32>,
    return
  }
  func.func @transform_0(%arg0: i32) -> (i32, i32) {
    %c0_i32 = arith.constant 0 : i32
    %c0_i32_0 = arith.constant 0 : i32
    return %arg0, %c0_i32 : i32, i32
  }
  func.func @transform_1(%arg0: i32) -> (i32, i32) {
    %c0_i32 = arith.constant 0 : i32
    %c0_i32_0 = arith.constant 0 : i32
    %c0_i32_1 = arith.constant 0 : i32
    return %c0_i32, %c0_i32_0 : i32, i32
  }
  func.func @transform_2(%arg0: i32) -> (i32, i32) {
    %c0_i32 = arith.constant 0 : i32
    %c0_i32_0 = arith.constant 0 : i32
    %c0_i32_1 = arith.constant 0 : i32
    return %c0_i32, %c0_i32_0 : i32, i32
  }
  func.func @transform_3(%arg0: i32) -> (i32, i32) {
    %c0_i32 = arith.constant 0 : i32
    %c0_i32_0 = arith.constant 0 : i32
    %c0_i32_1 = arith.constant 0 : i32
    return %c0_i32, %c0_i32_0 : i32, i32
  }
  func.func @transform_4(%arg0: i32) -> (i32, i32) {
    %c0_i32 = arith.constant 0 : i32
    %c0_i32_0 = arith.constant 0 : i32
    %c0_i32_1 = arith.constant 0 : i32
    return %c0_i32, %c0_i32_0 : i32, i32
  }
  func.func @transform_5(%arg0: i32) -> (i32, i32) {
    %c0_i32 = arith.constant 0 : i32
    %c0_i32_0 = arith.constant 0 : i32
    return %arg0, %c0_i32 : i32, i32
  }
}

</mosaic_0001>

<llo_original>
// kernel: tpu_custom_call.1
$region0: #{tpu_custom_call.1}
  #allocation0 [shape = 'u32[]', space=smem, size = 0x4, offset = 0x4, fixed_abs, tag = 'smem constant byte address 0x4 - core index']
  #allocation1 [shape = 'u32[144,128]{1,0:T(1,128)}', space=vmem, size = 0x12000, scoped, tag = 'internal scratch']
  %s0 = inlined_call_operand.vmem [shape: f32[8,128], index: 0, kind: input, shape index: {}]
  %s1 = inlined_call_operand.vmem [shape: f32[128,10], index: 1, kind: input, shape index: {}]
  %s2 = inlined_call_operand.vmem [shape: f32[1,10], index: 2, kind: input, shape index: {}]
  %s3 = inlined_call_operand.vmem [shape: f32[10,128], index: 3, kind: input, shape index: {}]
  %s4 = inlined_call_operand.vmem [shape: f32[1,128], index: 4, kind: input, shape index: {}]
  %s5 = inlined_call_operand.hbm [shape: f32[8,10], index: 5, kind: output, shape index: {}]
  %s6 = sld [smem:[#allocation0]]
  $region30: #{tpu_custom_call.1} parent=0
    _
  %s8 = ssub.s32 1, %s6
  %s9 = scalar_select 0, %s8, %s6
  $region1: #{tpu_custom_call.1} parent=0
    #allocation2 [shape = 'u8[4096]{0}', space=vmem, size = 0x1000, scoped, tag = 'output window, operand 0, single buffered']
    #allocation3 [shape = 's32[1]{0}', space=sflag, size = 0x4, scoped, tag = 'scoped memory for tpu_custom_call.1']
    %10 = vsyncpa [#allocation3], 0
    // Predicated region
    $region2: #{tpu_custom_call.1} parent=1 // pred_check
      _
    $region3: #{tpu_custom_call.1} parent=1 // pred_check_branch
      %12 = sbr.rel (0) target = $region5
    $region4: #{tpu_custom_call.1} parent=1 // pred_region
      _
    $region5: #{tpu_custom_call.1} parent=1 // pred_fallthru
      _
    // Predicated region
    $region6: #{tpu_custom_call.1} parent=1 // pred_check
      _
    $region7: #{tpu_custom_call.1} parent=1 // pred_check_branch
      %14 = sbr.rel (0) target = $region9
    $region8: #{tpu_custom_call.1} parent=1 // pred_region
      _
    $region9: #{tpu_custom_call.1} parent=1 // pred_fallthru
      _
    // Predicated region
    $region10: #{tpu_custom_call.1} parent=1 // pred_check
      _
    $region11: #{tpu_custom_call.1} parent=1 // pred_check_branch
      %16 = sbr.rel (0) target = $region13
    $region12: #{tpu_custom_call.1} parent=1 // pred_region
      _
    $region13: #{tpu_custom_call.1} parent=1 // pred_fallthru
      _
    // Predicated region
    $region14: #{tpu_custom_call.1} parent=1 // pred_check
      _
    $region15: #{tpu_custom_call.1} parent=1 // pred_check_branch
      %18 = sbr.rel (0) target = $region17
    $region16: #{tpu_custom_call.1} parent=1 // pred_region
      _
    $region17: #{tpu_custom_call.1} parent=1 // pred_fallthru
      _
    // Predicated region
    $region18: #{tpu_custom_call.1} parent=1 // pred_check
      _
    $region19: #{tpu_custom_call.1} parent=1 // pred_check_branch
      %20 = sbr.rel (0) target = $region21
    $region20: #{tpu_custom_call.1} parent=1 // pred_region
      _
    $region21: #{tpu_custom_call.1} parent=1 // pred_fallthru
      _
    %v21 = vld [vmem:[%s0] sm:$0xff]
    %v22 = vld [vmem:[%s1] sm:$0xff]
    %v23 = vld [vmem:[%s1 + $0x8] sm:$0xff]
    %v24 = vld [vmem:[%s1 + $0x10] sm:$0xff]
    %v25 = vld [vmem:[%s1 + $0x18] sm:$0xff]
    %v26 = vld [vmem:[%s1 + $0x20] sm:$0xff]
    %v27 = vld [vmem:[%s1 + $0x28] sm:$0xff]
    %v28 = vld [vmem:[%s1 + $0x30] sm:$0xff]
    %v29 = vld [vmem:[%s1 + $0x38] sm:$0xff]
    %v30 = vld [vmem:[%s1 + $0x40] sm:$0xff]
    %v31 = vld [vmem:[%s1 + $0x48] sm:$0xff]
    %v32 = vld [vmem:[%s1 + $0x50] sm:$0xff]
    %v33 = vld [vmem:[%s1 + $0x58] sm:$0xff]
    %v34 = vld [vmem:[%s1 + $0x60] sm:$0xff]
    %v35 = vld [vmem:[%s1 + $0x68] sm:$0xff]
    %v36 = vld [vmem:[%s1 + $0x70] sm:$0xff]
    %v37 = vld [vmem:[%s1 + $0x78] sm:$0xff]
    %v38 = vld [vmem:[%s2] sm:$0x1]
    %v40 = vlaneseq
    %v41 = vshrl.u32 %v40, 7
    %v42 = vsub.s32 0, %v41
    %v43 = vrot.slane %v38, %v42
    %45 = vmatprep.subr.mxu0 0.0
    %v46 = vand.u32 %v37, 4294901760
    %47 = vmatpush1.msra.mxu0 %v46
    %48 = vmatprep.subr.mxu0 0.0
    %v49 = vand.u32 %v36, 4294901760
    %50 = vmatpush1.msra.mxu0 %v49
    %51 = vmatprep.subr.mxu0 0.0
    %v52 = vand.u32 %v35, 4294901760
    %53 = vmatpush1.msra.mxu0 %v52
    %54 = vmatprep.subr.mxu0 0.0
    %v55 = vand.u32 %v34, 4294901760
    %56 = vmatpush1.msra.mxu0 %v55
    %57 = vmatprep.subr.mxu0 0.0
    %v58 = vand.u32 %v33, 4294901760
    %59 = vmatpush1.msra.mxu0 %v58
    %60 = vmatprep.subr.mxu0 0.0
    %v61 = vand.u32 %v32, 4294901760
    %62 = vmatpush1.msra.mxu0 %v61
    %63 = vmatprep.subr.mxu0 0.0
    %v64 = vand.u32 %v31, 4294901760
    %65 = vmatpush1.msra.mxu0 %v64
    %66 = vmatprep.subr.mxu0 0.0
    %v67 = vand.u32 %v30, 4294901760
    %68 = vmatpush1.msra.mxu0 %v67
    %69 = vmatprep.subr.mxu0 0.0
    %v70 = vand.u32 %v29, 4294901760
    %71 = vmatpush1.msra.mxu0 %v70
    %72 = vmatprep.subr.mxu0 0.0
    %v73 = vand.u32 %v28, 4294901760
    %74 = vmatpush1.msra.mxu0 %v73
    %75 = vmatprep.subr.mxu0 0.0
    %v76 = vand.u32 %v27, 4294901760
    %77 = vmatpush1.msra.mxu0 %v76
    %78 = vmatprep.subr.mxu0 0.0
    %v79 = vand.u32 %v26, 4294901760
    %80 = vmatpush1.msra.mxu0 %v79
    %81 = vmatprep.subr.mxu0 0.0
    %v82 = vand.u32 %v25, 4294901760
    %83 = vmatpush1.msra.mxu0 %v82
    %84 = vmatprep.subr.mxu0 0.0
    %v85 = vand.u32 %v24, 4294901760
    %86 = vmatpush1.msra.mxu0 %v85
    %87 = vmatprep.subr.mxu0 0.0
    %v88 = vand.u32 %v23, 4294901760
    %89 = vmatpush1.msra.mxu0 %v88
    %90 = vmatprep.subr.mxu0 0.0
    %v91 = vand.u32 %v22, 4294901760
    %92 = vmatpush1.msra.mxu0 %v91
    %93 = vmatprep.subr.mxu0 0.0
    %94 = vmatpush2.msra.mxu0 0.0
    %95 = vmatprep.subr.mxu0 0.0
    %96 = vmatpush2.msra.mxu0 0.0
    %97 = vmatprep.subr.mxu0 0.0
    %98 = vmatpush2.msra.mxu0 0.0
    %99 = vmatprep.subr.mxu0 0.0
    %100 = vmatpush2.msra.mxu0 0.0
    %101 = vmatprep.subr.mxu0 0.0
    %102 = vmatpush2.msra.mxu0 0.0
    %103 = vmatprep.subr.mxu0 0.0
    %104 = vmatpush2.msra.mxu0 0.0
    %105 = vmatprep.subr.mxu0 0.0
    %106 = vmatpush2.msra.mxu0 0.0
    %107 = vmatprep.subr.mxu0 0.0
    %108 = vmatpush2.msra.mxu0 0.0
    %109 = vmatprep.subr.mxu0 0.0
    %110 = vmatpush2.msra.mxu0 0.0
    %111 = vmatprep.subr.mxu0 0.0
    %112 = vmatpush2.msra.mxu0 0.0
    %113 = vmatprep.subr.mxu0 0.0
    %114 = vmatpush2.msra.mxu0 0.0
    %115 = vmatprep.subr.mxu0 0.0
    %116 = vmatpush2.msra.mxu0 0.0
    %117 = vmatprep.subr.mxu0 0.0
    %118 = vmatpush2.msra.mxu0 0.0
    %119 = vmatprep.subr.mxu0 0.0
    %120 = vmatpush2.msra.mxu0 0.0
    %121 = vmatprep.subr.mxu0 0.0
    %122 = vmatpush2.msra.mxu0 0.0
    %123 = vmatprep.subr.mxu0 0.0
    %124 = vmatpush2.msra.mxu0 0.0
    %125 = vmatprep.mubr.f32.mxu0 0.0
    %v126 = vand.u32 %v21, 4294901760
    %v127 = vsub.f32 %v21, %v126
    %v128 = vand.u32 %v127, 4294901760
    %v129 = vsub.f32 %v127, %v128
    %v130 = vand.u32 %v129, 4294901760
    %131 = vmatmul.mubr.f32.gmra.mxu0 %v130
    %v132 = vpop.f32.mrf.mxu0
    %v133 = vadd.f32 %v43, %v132
    %v134 = vpop.f32.mrf.mxu0
    %135 = vdwg.mxu0
    %136 = vmatprep.subr.mxu0 0.0
    %v137 = vand.u32 %v37, 4294901760
    %v138 = vsub.f32 %v37, %v137
    %v139 = vand.u32 %v138, 4294901760
    %v140 = vsub.f32 %v138, %v139
    %v141 = vand.u32 %v140, 4294901760
    %142 = vmatpush1.msra.mxu0 %v141
    %143 = vmatprep.subr.mxu0 0.0
    %v144 = vand.u32 %v36, 4294901760
    %v145 = vsub.f32 %v36, %v144
    %v146 = vand.u32 %v145, 4294901760
    %v147 = vsub.f32 %v145, %v146
    %v148 = vand.u32 %v147, 4294901760
    %149 = vmatpush1.msra.mxu0 %v148
    %150 = vmatprep.subr.mxu0 0.0
    %v151 = vand.u32 %v35, 4294901760
    %v152 = vsub.f32 %v35, %v151
    %v153 = vand.u32 %v152, 4294901760
    %v154 = vsub.f32 %v152, %v153
    %v155 = vand.u32 %v154, 4294901760
    %156 = vmatpush1.msra.mxu0 %v155
    %157 = vmatprep.subr.mxu0 0.0
    %v158 = vand.u32 %v34, 4294901760
    %v159 = vsub.f32 %v34, %v158
    %v160 = vand.u32 %v159, 4294901760
    %v161 = vsub.f32 %v159, %v160
    %v162 = vand.u32 %v161, 4294901760
    %163 = vmatpush1.msra.mxu0 %v162
    %164 = vmatprep.subr.mxu0 0.0
    %v165 = vand.u32 %v33, 4294901760
    %v166 = vsub.f32 %v33, %v165
    %v167 = vand.u32 %v166, 4294901760
    %v168 = vsub.f32 %v166, %v167
    %v169 = vand.u32 %v168, 4294901760
    %170 = vmatpush1.msra.mxu0 %v169
    %171 = vmatprep.subr.mxu0 0.0
    %v172 = vand.u32 %v32, 4294901760
    %v173 = vsub.f32 %v32, %v172
    %v174 = vand.u32 %v173, 4294901760
    %v175 = vsub.f32 %v173, %v174
    %v176 = vand.u32 %v175, 4294901760
    %177 = vmatpush1.msra.mxu0 %v176
    %178 = vmatprep.subr.mxu0 0.0
    %v179 = vand.u32 %v31, 4294901760
    %v180 = vsub.f32 %v31, %v179
    %v181 = vand.u32 %v180, 4294901760
    %v182 = vsub.f32 %v180, %v181
    %v183 = vand.u32 %v182, 4294901760
    %184 = vmatpush1.msra.mxu0 %v183
    %185 = vmatprep.subr.mxu0 0.0
    %v186 = vand.u32 %v30, 4294901760
    %v187 = vsub.f32 %v30, %v186
    %v188 = vand.u32 %v187, 4294901760
    %v189 = vsub.f32 %v187, %v188
    %v190 = vand.u32 %v189, 4294901760
    %191 = vmatpush1.msra.mxu0 %v190
    %192 = vmatprep.subr.mxu0 0.0
    %v193 = vand.u32 %v29, 4294901760
    %v194 = vsub.f32 %v29, %v193
    %v195 = vand.u32 %v194, 4294901760
    %v196 = vsub.f32 %v194, %v195
    %v197 = vand.u32 %v196, 4294901760
    %198 = vmatpush1.msra.mxu0 %v197
    %199 = vmatprep.subr.mxu0 0.0
    %v200 = vand.u32 %v28, 4294901760
    %v201 = vsub.f32 %v28, %v200
    %v202 = vand.u32 %v201, 4294901760
    %v203 = vsub.f32 %v201, %v202
    %v204 = vand.u32 %v203, 4294901760
    %205 = vmatpush1.msra.mxu0 %v204
    %206 = vmatprep.subr.mxu0 0.0
    %v207 = vand.u32 %v27, 4294901760
    %v208 = vsub.f32 %v27, %v207
    %v209 = vand.u32 %v208, 4294901760
    %v210 = vsub.f32 %v208, %v209
    %v211 = vand.u32 %v210, 4294901760
    %212 = vmatpush1.msra.mxu0 %v211
    %213 = vmatprep.subr.mxu0 0.0
    %v214 = vand.u32 %v26, 4294901760
    %v215 = vsub.f32 %v26, %v214
    %v216 = vand.u32 %v215, 4294901760
    %v217 = vsub.f32 %v215, %v216
    %v218 = vand.u32 %v217, 4294901760
    %219 = vmatpush1.msra.mxu0 %v218
    %220 = vmatprep.subr.mxu0 0.0
    %v221 = vand.u32 %v25, 4294901760
    %v222 = vsub.f32 %v25, %v221
    %v223 = vand.u32 %v222, 4294901760
    %v224 = vsub.f32 %v222, %v223
    %v225 = vand.u32 %v224, 4294901760
    %226 = vmatpush1.msra.mxu0 %v225
    %227 = vmatprep.subr.mxu0 0.0
    %v228 = vand.u32 %v24, 4294901760
    %v229 = vsub.f32 %v24, %v228
    %v230 = vand.u32 %v229, 4294901760
    %v231 = vsub.f32 %v229, %v230
    %v232 = vand.u32 %v231, 4294901760
    %233 = vmatpush1.msra.mxu0 %v232
    %234 = vmatprep.subr.mxu0 0.0
    %v235 = vand.u32 %v23, 4294901760
    %v236 = vsub.f32 %v23, %v235
    %v237 = vand.u32 %v236, 4294901760
    %v238 = vsub.f32 %v236, %v237
    %v239 = vand.u32 %v238, 4294901760
    %240 = vmatpush1.msra.mxu0 %v239
    %241 = vmatprep.subr.mxu0 0.0
    %v242 = vand.u32 %v22, 4294901760
    %v243 = vsub.f32 %v22, %v242
    %v244 = vand.u32 %v243, 4294901760
    %v245 = vsub.f32 %v243, %v244
    %v246 = vand.u32 %v245, 4294901760
    %247 = vmatpush1.msra.mxu0 %v246
    %248 = vmatprep.subr.mxu0 0.0
    %249 = vmatpush2.msra.mxu0 0.0
    %250 = vmatprep.subr.mxu0 0.0
    %251 = vmatpush2.msra.mxu0 0.0
    %252 = vmatprep.subr.mxu0 0.0
    %253 = vmatpush2.msra.mxu0 0.0
    %254 = vmatprep.subr.mxu0 0.0
    %255 = vmatpush2.msra.mxu0 0.0
    %256 = vmatprep.subr.mxu0 0.0
    %257 = vmatpush2.msra.mxu0 0.0
    %258 = vmatprep.subr.mxu0 0.0
    %259 = vmatpush2.msra.mxu0 0.0
    %260 = vmatprep.subr.mxu0 0.0
    %261 = vmatpush2.msra.mxu0 0.0
    %262 = vmatprep.subr.mxu0 0.0
    %263 = vmatpush2.msra.mxu0 0.0
    %264 = vmatprep.subr.mxu0 0.0
    %265 = vmatpush2.msra.mxu0 0.0
    %266 = vmatprep.subr.mxu0 0.0
    %267 = vmatpush2.msra.mxu0 0.0
    %268 = vmatprep.subr.mxu0 0.0
    %269 = vmatpush2.msra.mxu0 0.0
    %270 = vmatprep.subr.mxu0 0.0
    %271 = vmatpush2.msra.mxu0 0.0
    %272 = vmatprep.subr.mxu0 0.0
    %273 = vmatpush2.msra.mxu0 0.0
    %274 = vmatprep.subr.mxu0 0.0
    %275 = vmatpush2.msra.mxu0 0.0
    %276 = vmatprep.subr.mxu0 0.0
    %277 = vmatpush2.msra.mxu0 0.0
    %278 = vmatprep.subr.mxu0 0.0
    %279 = vmatpush2.msra.mxu0 0.0
    %280 = vmatprep.mubr.f32.mxu0 0.0
    %v281 = vand.u32 %v21, 4294901760
    %282 = vmatmul.mubr.f32.gmra.mxu0 %v281
    %v283 = vpop.f32.mrf.mxu0
    %v284 = vadd.f32 %v133, %v283
    %v285 = vpop.f32.mrf.mxu0
    %286 = vdwg.mxu0
    %287 = vmatprep.subr.mxu0 0.0
    %v288 = vand.u32 %v37, 4294901760
    %v289 = vsub.f32 %v37, %v288
    %290 = vmatpush1.msra.mxu0 %v289
    %291 = vmatprep.subr.mxu0 0.0
    %v292 = vand.u32 %v36, 4294901760
    %v293 = vsub.f32 %v36, %v292
    %294 = vmatpush1.msra.mxu0 %v293
    %295 = vmatprep.subr.mxu0 0.0
    %v296 = vand.u32 %v35, 4294901760
    %v297 = vsub.f32 %v35, %v296
    %298 = vmatpush1.msra.mxu0 %v297
    %299 = vmatprep.subr.mxu0 0.0
    %v300 = vand.u32 %v34, 4294901760
    %v301 = vsub.f32 %v34, %v300
    %302 = vmatpush1.msra.mxu0 %v301
    %303 = vmatprep.subr.mxu0 0.0
    %v304 = vand.u32 %v33, 4294901760
    %v305 = vsub.f32 %v33, %v304
    %306 = vmatpush1.msra.mxu0 %v305
    %307 = vmatprep.subr.mxu0 0.0
    %v308 = vand.u32 %v32, 4294901760
    %v309 = vsub.f32 %v32, %v308
    %310 = vmatpush1.msra.mxu0 %v309
    %311 = vmatprep.subr.mxu0 0.0
    %v312 = vand.u32 %v31, 4294901760
    %v313 = vsub.f32 %v31, %v312
    %314 = vmatpush1.msra.mxu0 %v313
    %315 = vmatprep.subr.mxu0 0.0
    %v316 = vand.u32 %v30, 4294901760
    %v317 = vsub.f32 %v30, %v316
    %318 = vmatpush1.msra.mxu0 %v317
    %319 = vmatprep.subr.mxu0 0.0
    %v320 = vand.u32 %v29, 4294901760
    %v321 = vsub.f32 %v29, %v320
    %322 = vmatpush1.msra.mxu0 %v321
    %323 = vmatprep.subr.mxu0 0.0
    %v324 = vand.u32 %v28, 4294901760
    %v325 = vsub.f32 %v28, %v324
    %326 = vmatpush1.msra.mxu0 %v325
    %327 = vmatprep.subr.mxu0 0.0
    %v328 = vand.u32 %v27, 4294901760
    %v329 = vsub.f32 %v27, %v328
    %330 = vmatpush1.msra.mxu0 %v329
    %331 = vmatprep.subr.mxu0 0.0
    %v332 = vand.u32 %v26, 4294901760
    %v333 = vsub.f32 %v26, %v332
    %334 = vmatpush1.msra.mxu0 %v333
    %335 = vmatprep.subr.mxu0 0.0
    %v336 = vand.u32 %v25, 4294901760
    %v337 = vsub.f32 %v25, %v336
    %338 = vmatpush1.msra.mxu0 %v337
    %339 = vmatprep.subr.mxu0 0.0
    %v340 = vand.u32 %v24, 4294901760
    %v341 = vsub.f32 %v24, %v340
    %342 = vmatpush1.msra.mxu0 %v341
    %343 = vmatprep.subr.mxu0 0.0
    %v344 = vand.u32 %v23, 4294901760
    %v345 = vsub.f32 %v23, %v344
    %346 = vmatpush1.msra.mxu0 %v345
    %347 = vmatprep.subr.mxu0 0.0
    %v348 = vand.u32 %v22, 4294901760
    %v349 = vsub.f32 %v22, %v348
    %350 = vmatpush1.msra.mxu0 %v349
    %351 = vmatprep.subr.mxu0 0.0
    %352 = vmatpush2.msra.mxu0 0.0
    %353 = vmatprep.subr.mxu0 0.0
    %354 = vmatpush2.msra.mxu0 0.0
    %355 = vmatprep.subr.mxu0 0.0
    %356 = vmatpush2.msra.mxu0 0.0
    %357 = vmatprep.subr.mxu0 0.0
    %358 = vmatpush2.msra.mxu0 0.0
    %359 = vmatprep.subr.mxu0 0.0
    %360 = vmatpush2.msra.mxu0 0.0
    %361 = vmatprep.subr.mxu0 0.0
    %362 = vmatpush2.msra.mxu0 0.0
    %363 = vmatprep.subr.mxu0 0.0
    %364 = vmatpush2.msra.mxu0 0.0
    %365 = vmatprep.subr.mxu0 0.0
    %366 = vmatpush2.msra.mxu0 0.0
    %367 = vmatprep.subr.mxu0 0.0
    %368 = vmatpush2.msra.mxu0 0.0
    %369 = vmatprep.subr.mxu0 0.0
    %370 = vmatpush2.msra.mxu0 0.0
    %371 = vmatprep.subr.mxu0 0.0
    %372 = vmatpush2.msra.mxu0 0.0
    %373 = vmatprep.subr.mxu0 0.0
    %374 = vmatpush2.msra.mxu0 0.0
    %375 = vmatprep.subr.mxu0 0.0
    %376 = vmatpush2.msra.mxu0 0.0
    %377 = vmatprep.subr.mxu0 0.0
    %378 = vmatpush2.msra.mxu0 0.0
    %379 = vmatprep.subr.mxu0 0.0
    %380 = vmatpush2.msra.mxu0 0.0
    %381 = vmatprep.subr.mxu0 0.0
    %382 = vmatpush2.msra.mxu0 0.0
    %383 = vmatprep.mubr.f32.mxu0 0.0
    %v384 = vand.u32 %v21, 4294901760
    %v385 = vsub.f32 %v21, %v384
    %386 = vmatmul.mubr.f32.gmra.mxu0 %v385
    %v387 = vpop.f32.mrf.mxu0
    %v388 = vadd.f32 %v284, %v387
    %v389 = vpop.f32.mrf.mxu0
    %390 = vdwg.mxu0
    %391 = vmatprep.subr.mxu0 0.0
    %v392 = vand.u32 %v37, 4294901760
    %393 = vmatpush1.msra.mxu0 %v392
    %394 = vmatprep.subr.mxu0 0.0
    %v395 = vand.u32 %v36, 4294901760
    %396 = vmatpush1.msra.mxu0 %v395
    %397 = vmatprep.subr.mxu0 0.0
    %v398 = vand.u32 %v35, 4294901760
    %399 = vmatpush1.msra.mxu0 %v398
    %400 = vmatprep.subr.mxu0 0.0
    %v401 = vand.u32 %v34, 4294901760
    %402 = vmatpush1.msra.mxu0 %v401
    %403 = vmatprep.subr.mxu0 0.0
    %v404 = vand.u32 %v33, 4294901760
    %405 = vmatpush1.msra.mxu0 %v404
    %406 = vmatprep.subr.mxu0 0.0
    %v407 = vand.u32 %v32, 4294901760
    %408 = vmatpush1.msra.mxu0 %v407
    %409 = vmatprep.subr.mxu0 0.0
    %v410 = vand.u32 %v31, 4294901760
    %411 = vmatpush1.msra.mxu0 %v410
    %412 = vmatprep.subr.mxu0 0.0
    %v413 = vand.u32 %v30, 4294901760
    %414 = vmatpush1.msra.mxu0 %v413
    %415 = vmatprep.subr.mxu0 0.0
    %v416 = vand.u32 %v29, 4294901760
    %417 = vmatpush1.msra.mxu0 %v416
    %418 = vmatprep.subr.mxu0 0.0
    %v419 = vand.u32 %v28, 4294901760
    %420 = vmatpush1.msra.mxu0 %v419
    %421 = vmatprep.subr.mxu0 0.0
    %v422 = vand.u32 %v27, 4294901760
    %423 = vmatpush1.msra.mxu0 %v422
    %424 = vmatprep.subr.mxu0 0.0
    %v425 = vand.u32 %v26, 4294901760
    %426 = vmatpush1.msra.mxu0 %v425
    %427 = vmatprep.subr.mxu0 0.0
    %v428 = vand.u32 %v25, 4294901760
    %429 = vmatpush1.msra.mxu0 %v428
    %430 = vmatprep.subr.mxu0 0.0
    %v431 = vand.u32 %v24, 4294901760
    %432 = vmatpush1.msra.mxu0 %v431
    %433 = vmatprep.subr.mxu0 0.0
    %v434 = vand.u32 %v23, 4294901760
    %435 = vmatpush1.msra.mxu0 %v434
    %436 = vmatprep.subr.mxu0 0.0
    %v437 = vand.u32 %v22, 4294901760
    %438 = vmatpush1.msra.mxu0 %v437
    %439 = vmatprep.subr.mxu0 0.0
    %440 = vmatpush2.msra.mxu0 0.0
    %441 = vmatprep.subr.mxu0 0.0
    %442 = vmatpush2.msra.mxu0 0.0
    %443 = vmatprep.subr.mxu0 0.0
    %444 = vmatpush2.msra.mxu0 0.0
    %445 = vmatprep.subr.mxu0 0.0
    %446 = vmatpush2.msra.mxu0 0.0
    %447 = vmatprep.subr.mxu0 0.0
    %448 = vmatpush2.msra.mxu0 0.0
    %449 = vmatprep.subr.mxu0 0.0
    %450 = vmatpush2.msra.mxu0 0.0
    %451 = vmatprep.subr.mxu0 0.0
    %452 = vmatpush2.msra.mxu0 0.0
    %453 = vmatprep.subr.mxu0 0.0
    %454 = vmatpush2.msra.mxu0 0.0
    %455 = vmatprep.subr.mxu0 0.0
    %456 = vmatpush2.msra.mxu0 0.0
    %457 = vmatprep.subr.mxu0 0.0
    %458 = vmatpush2.msra.mxu0 0.0
    %459 = vmatprep.subr.mxu0 0.0
    %460 = vmatpush2.msra.mxu0 0.0
    %461 = vmatprep.subr.mxu0 0.0
    %462 = vmatpush2.msra.mxu0 0.0
    %463 = vmatprep.subr.mxu0 0.0
    %464 = vmatpush2.msra.mxu0 0.0
    %465 = vmatprep.subr.mxu0 0.0
    %466 = vmatpush2.msra.mxu0 0.0
    %467 = vmatprep.subr.mxu0 0.0
    %468 = vmatpush2.msra.mxu0 0.0
    %469 = vmatprep.subr.mxu0 0.0
    %470 = vmatpush2.msra.mxu0 0.0
    %471 = vmatprep.mubr.f32.mxu0 0.0
    %v472 = vand.u32 %v21, 4294901760
    %v473 = vsub.f32 %v21, %v472
    %v474 = vand.u32 %v473, 4294901760
    %475 = vmatmul.mubr.f32.gmra.mxu0 %v474
    %v476 = vpop.f32.mrf.mxu0
    %v477 = vadd.f32 %v388, %v476
    %v478 = vpop.f32.mrf.mxu0
    %479 = vdwg.mxu0
    %480 = vmatprep.subr.mxu0 0.0
    %v481 = vand.u32 %v37, 4294901760
    %v482 = vsub.f32 %v37, %v481
    %v483 = vand.u32 %v482, 4294901760
    %484 = vmatpush1.msra.mxu0 %v483
    %485 = vmatprep.subr.mxu0 0.0
    %v486 = vand.u32 %v36, 4294901760
    %v487 = vsub.f32 %v36, %v486
    %v488 = vand.u32 %v487, 4294901760
    %489 = vmatpush1.msra.mxu0 %v488
    %490 = vmatprep.subr.mxu0 0.0
    %v491 = vand.u32 %v35, 4294901760
    %v492 = vsub.f32 %v35, %v491
    %v493 = vand.u32 %v492, 4294901760
    %494 = vmatpush1.msra.mxu0 %v493
    %495 = vmatprep.subr.mxu0 0.0
    %v496 = vand.u32 %v34, 4294901760
    %v497 = vsub.f32 %v34, %v496
    %v498 = vand.u32 %v497, 4294901760
    %499 = vmatpush1.msra.mxu0 %v498
    %500 = vmatprep.subr.mxu0 0.0
    %v501 = vand.u32 %v33, 4294901760
    %v502 = vsub.f32 %v33, %v501
    %v503 = vand.u32 %v502, 4294901760
    %504 = vmatpush1.msra.mxu0 %v503
    %505 = vmatprep.subr.mxu0 0.0
    %v506 = vand.u32 %v32, 4294901760
    %v507 = vsub.f32 %v32, %v506
    %v508 = vand.u32 %v507, 4294901760
    %509 = vmatpush1.msra.mxu0 %v508
    %510 = vmatprep.subr.mxu0 0.0
    %v511 = vand.u32 %v31, 4294901760
    %v512 = vsub.f32 %v31, %v511
    %v513 = vand.u32 %v512, 4294901760
    %514 = vmatpush1.msra.mxu0 %v513
    %515 = vmatprep.subr.mxu0 0.0
    %v516 = vand.u32 %v30, 4294901760
    %v517 = vsub.f32 %v30, %v516
    %v518 = vand.u32 %v517, 4294901760
    %519 = vmatpush1.msra.mxu0 %v518
    %520 = vmatprep.subr.mxu0 0.0
    %v521 = vand.u32 %v29, 4294901760
    %v522 = vsub.f32 %v29, %v521
    %v523 = vand.u32 %v522, 4294901760
    %524 = vmatpush1.msra.mxu0 %v523
    %525 = vmatprep.subr.mxu0 0.0
    %v526 = vand.u32 %v28, 4294901760
    %v527 = vsub.f32 %v28, %v526
    %v528 = vand.u32 %v527, 4294901760
    %529 = vmatpush1.msra.mxu0 %v528
    %530 = vmatprep.subr.mxu0 0.0
    %v531 = vand.u32 %v27, 4294901760
    %v532 = vsub.f32 %v27, %v531
    %v533 = vand.u32 %v532, 4294901760
    %534 = vmatpush1.msra.mxu0 %v533
    %535 = vmatprep.subr.mxu0 0.0
    %v536 = vand.u32 %v26, 4294901760
    %v537 = vsub.f32 %v26, %v536
    %v538 = vand.u32 %v537, 4294901760
    %539 = vmatpush1.msra.mxu0 %v538
    %540 = vmatprep.subr.mxu0 0.0
    %v541 = vand.u32 %v25, 4294901760
    %v542 = vsub.f32 %v25, %v541
    %v543 = vand.u32 %v542, 4294901760
    %544 = vmatpush1.msra.mxu0 %v543
    %545 = vmatprep.subr.mxu0 0.0
    %v546 = vand.u32 %v24, 4294901760
    %v547 = vsub.f32 %v24, %v546
    %v548 = vand.u32 %v547, 4294901760
    %549 = vmatpush1.msra.mxu0 %v548
    %550 = vmatprep.subr.mxu0 0.0
    %v551 = vand.u32 %v23, 4294901760
    %v552 = vsub.f32 %v23, %v551
    %v553 = vand.u32 %v552, 4294901760
    %554 = vmatpush1.msra.mxu0 %v553
    %555 = vmatprep.subr.mxu0 0.0
    %v556 = vand.u32 %v22, 4294901760
    %v557 = vsub.f32 %v22, %v556
    %v558 = vand.u32 %v557, 4294901760
    %559 = vmatpush1.msra.mxu0 %v558
    %560 = vmatprep.subr.mxu0 0.0
    %561 = vmatpush2.msra.mxu0 0.0
    %562 = vmatprep.subr.mxu0 0.0
    %563 = vmatpush2.msra.mxu0 0.0
    %564 = vmatprep.subr.mxu0 0.0
    %565 = vmatpush2.msra.mxu0 0.0
    %566 = vmatprep.subr.mxu0 0.0
    %567 = vmatpush2.msra.mxu0 0.0
    %568 = vmatprep.subr.mxu0 0.0
    %569 = vmatpush2.msra.mxu0 0.0
    %570 = vmatprep.subr.mxu0 0.0
    %571 = vmatpush2.msra.mxu0 0.0
    %572 = vmatprep.subr.mxu0 0.0
    %573 = vmatpush2.msra.mxu0 0.0
    %574 = vmatprep.subr.mxu0 0.0
    %575 = vmatpush2.msra.mxu0 0.0
    %576 = vmatprep.subr.mxu0 0.0
    %577 = vmatpush2.msra.mxu0 0.0
    %578 = vmatprep.subr.mxu0 0.0
    %579 = vmatpush2.msra.mxu0 0.0
    %580 = vmatprep.subr.mxu0 0.0
    %581 = vmatpush2.msra.mxu0 0.0
    %582 = vmatprep.subr.mxu0 0.0
    %583 = vmatpush2.msra.mxu0 0.0
    %584 = vmatprep.subr.mxu0 0.0
    %585 = vmatpush2.msra.mxu0 0.0
    %586 = vmatprep.subr.mxu0 0.0
    %587 = vmatpush2.msra.mxu0 0.0
    %588 = vmatprep.subr.mxu0 0.0
    %589 = vmatpush2.msra.mxu0 0.0
    %590 = vmatprep.subr.mxu0 0.0
    %591 = vmatpush2.msra.mxu0 0.0
    %592 = vmatprep.mubr.f32.mxu0 0.0
    %v593 = vand.u32 %v21, 4294901760
    %594 = vmatmul.mubr.f32.gmra.mxu0 %v593
    %v595 = vpop.f32.mrf.mxu0
    %v596 = vadd.f32 %v477, %v595
    %v597 = vpop.f32.mrf.mxu0
    %598 = vdwg.mxu0
    %599 = vmatprep.subr.mxu0 0.0
    %v600 = vand.u32 %v37, 4294901760
    %601 = vmatpush1.msra.mxu0 %v600
    %602 = vmatprep.subr.mxu0 0.0
    %v603 = vand.u32 %v36, 4294901760
    %604 = vmatpush1.msra.mxu0 %v603
    %605 = vmatprep.subr.mxu0 0.0
    %v606 = vand.u32 %v35, 4294901760
    %607 = vmatpush1.msra.mxu0 %v606
    %608 = vmatprep.subr.mxu0 0.0
    %v609 = vand.u32 %v34, 4294901760
    %610 = vmatpush1.msra.mxu0 %v609
    %611 = vmatprep.subr.mxu0 0.0
    %v612 = vand.u32 %v33, 4294901760
    %613 = vmatpush1.msra.mxu0 %v612
    %614 = vmatprep.subr.mxu0 0.0
    %v615 = vand.u32 %v32, 4294901760
    %616 = vmatpush1.msra.mxu0 %v615
    %617 = vmatprep.subr.mxu0 0.0
    %v618 = vand.u32 %v31, 4294901760
    %619 = vmatpush1.msra.mxu0 %v618
    %620 = vmatprep.subr.mxu0 0.0
    %v621 = vand.u32 %v30, 4294901760
    %622 = vmatpush1.msra.mxu0 %v621
    %623 = vmatprep.subr.mxu0 0.0
    %v624 = vand.u32 %v29, 4294901760
    %625 = vmatpush1.msra.mxu0 %v624
    %626 = vmatprep.subr.mxu0 0.0
    %v627 = vand.u32 %v28, 4294901760
    %628 = vmatpush1.msra.mxu0 %v627
    %629 = vmatprep.subr.mxu0 0.0
    %v630 = vand.u32 %v27, 4294901760
    %631 = vmatpush1.msra.mxu0 %v630
    %632 = vmatprep.subr.mxu0 0.0
    %v633 = vand.u32 %v26, 4294901760
    %634 = vmatpush1.msra.mxu0 %v633
    %635 = vmatprep.subr.mxu0 0.0
    %v636 = vand.u32 %v25, 4294901760
    %637 = vmatpush1.msra.mxu0 %v636
    %638 = vmatprep.subr.mxu0 0.0
    %v639 = vand.u32 %v24, 4294901760
    %640 = vmatpush1.msra.mxu0 %v639
    %641 = vmatprep.subr.mxu0 0.0
    %v642 = vand.u32 %v23, 4294901760
    %643 = vmatpush1.msra.mxu0 %v642
    %644 = vmatprep.subr.mxu0 0.0
    %v645 = vand.u32 %v22, 4294901760
    %646 = vmatpush1.msra.mxu0 %v645
    %647 = vmatprep.subr.mxu0 0.0
    %648 = vmatpush2.msra.mxu0 0.0
    %649 = vmatprep.subr.mxu0 0.0
    %650 = vmatpush2.msra.mxu0 0.0
    %651 = vmatprep.subr.mxu0 0.0
    %652 = vmatpush2.msra.mxu0 0.0
    %653 = vmatprep.subr.mxu0 0.0
    %654 = vmatpush2.msra.mxu0 0.0
    %655 = vmatprep.subr.mxu0 0.0
    %656 = vmatpush2.msra.mxu0 0.0
    %657 = vmatprep.subr.mxu0 0.0
    %658 = vmatpush2.msra.mxu0 0.0
    %659 = vmatprep.subr.mxu0 0.0
    %660 = vmatpush2.msra.mxu0 0.0
    %661 = vmatprep.subr.mxu0 0.0
    %662 = vmatpush2.msra.mxu0 0.0
    %663 = vmatprep.subr.mxu0 0.0
    %664 = vmatpush2.msra.mxu0 0.0
    %665 = vmatprep.subr.mxu0 0.0
    %666 = vmatpush2.msra.mxu0 0.0
    %667 = vmatprep.subr.mxu0 0.0
    %668 = vmatpush2.msra.mxu0 0.0
    %669 = vmatprep.subr.mxu0 0.0
    %670 = vmatpush2.msra.mxu0 0.0
    %671 = vmatprep.subr.mxu0 0.0
    %672 = vmatpush2.msra.mxu0 0.0
    %673 = vmatprep.subr.mxu0 0.0
    %674 = vmatpush2.msra.mxu0 0.0
    %675 = vmatprep.subr.mxu0 0.0
    %676 = vmatpush2.msra.mxu0 0.0
    %677 = vmatprep.subr.mxu0 0.0
    %678 = vmatpush2.msra.mxu0 0.0
    %679 = vmatprep.mubr.f32.mxu0 0.0
    %v680 = vand.u32 %v21, 4294901760
    %681 = vmatmul.mubr.f32.gmra.mxu0 %v680
    %v682 = vpop.f32.mrf.mxu0
    %v683 = vadd.f32 %v596, %v682
    %v684 = vpop.f32.mrf.mxu0
    %685 = vdwg.mxu0
    %v686 = vmax.f32 %v683, 0.0
    %v687 = vld [vmem:[%s3] sm:$0xff]
    %v688 = vld [vmem:[%s3 + $0x8] sm:$0x3]
    %v689 = vld [vmem:[%s4] sm:$0x1]
    %v691 = vlaneseq
    %v692 = vshrl.u32 %v691, 7
    %v693 = vsub.s32 0, %v692
    %v694 = vrot.slane %v689, %v693
    %vm696 = vcmask 80896
    %v698 = vsel %vm696, %v686, 0
    %vm700 = vcmask 1041408
    %v702 = vsel %vm700, %v688, 0
    %704 = vmatprep.subr.mxu0 0.0
    %705 = vmatpush1.msra.mxu0 0.0
    %706 = vmatprep.subr.mxu0 0.0
    %707 = vmatpush1.msra.mxu0 0.0
    %708 = vmatprep.subr.mxu0 0.0
    %709 = vmatpush1.msra.mxu0 0.0
    %710 = vmatprep.subr.mxu0 0.0
    %711 = vmatpush1.msra.mxu0 0.0
    %712 = vmatprep.subr.mxu0 0.0
    %713 = vmatpush1.msra.mxu0 0.0
    %714 = vmatprep.subr.mxu0 0.0
    %715 = vmatpush1.msra.mxu0 0.0
    %716 = vmatprep.subr.mxu0 0.0
    %717 = vmatpush1.msra.mxu0 0.0
    %718 = vmatprep.subr.mxu0 0.0
    %719 = vmatpush1.msra.mxu0 0.0
    %720 = vmatprep.subr.mxu0 0.0
    %721 = vmatpush1.msra.mxu0 0.0
    %722 = vmatprep.subr.mxu0 0.0
    %723 = vmatpush1.msra.mxu0 0.0
    %724 = vmatprep.subr.mxu0 0.0
    %725 = vmatpush1.msra.mxu0 0.0
    %726 = vmatprep.subr.mxu0 0.0
    %727 = vmatpush1.msra.mxu0 0.0
    %728 = vmatprep.subr.mxu0 0.0
    %729 = vmatpush1.msra.mxu0 0.0
    %730 = vmatprep.subr.mxu0 0.0
    %731 = vmatpush1.msra.mxu0 0.0
    %732 = vmatprep.subr.mxu0 0.0
    %v733 = vand.u32 %v702, 4294901760
    %734 = vmatpush1.msra.mxu0 %v733
    %735 = vmatprep.subr.mxu0 0.0
    %v736 = vand.u32 %v687, 4294901760
    %737 = vmatpush1.msra.mxu0 %v736
    %738 = vmatprep.subr.mxu0 0.0
    %739 = vmatpush2.msra.mxu0 0.0
    %740 = vmatprep.subr.mxu0 0.0
    %741 = vmatpush2.msra.mxu0 0.0
    %742 = vmatprep.subr.mxu0 0.0
    %743 = vmatpush2.msra.mxu0 0.0
    %744 = vmatprep.subr.mxu0 0.0
    %745 = vmatpush2.msra.mxu0 0.0
    %746 = vmatprep.subr.mxu0 0.0
    %747 = vmatpush2.msra.mxu0 0.0
    %748 = vmatprep.subr.mxu0 0.0
    %749 = vmatpush2.msra.mxu0 0.0
    %750 = vmatprep.subr.mxu0 0.0
    %751 = vmatpush2.msra.mxu0 0.0
    %752 = vmatprep.subr.mxu0 0.0
    %753 = vmatpush2.msra.mxu0 0.0
    %754 = vmatprep.subr.mxu0 0.0
    %755 = vmatpush2.msra.mxu0 0.0
    %756 = vmatprep.subr.mxu0 0.0
    %757 = vmatpush2.msra.mxu0 0.0
    %758 = vmatprep.subr.mxu0 0.0
    %759 = vmatpush2.msra.mxu0 0.0
    %760 = vmatprep.subr.mxu0 0.0
    %761 = vmatpush2.msra.mxu0 0.0
    %762 = vmatprep.subr.mxu0 0.0
    %763 = vmatpush2.msra.mxu0 0.0
    %764 = vmatprep.subr.mxu0 0.0
    %765 = vmatpush2.msra.mxu0 0.0
    %766 = vmatprep.subr.mxu0 0.0
    %767 = vmatpush2.msra.mxu0 0.0
    %768 = vmatprep.subr.mxu0 0.0
    %769 = vmatpush2.msra.mxu0 0.0
    %770 = vmatprep.mubr.f32.mxu0 0.0
    %v771 = vand.u32 %v698, 4294901760
    %v772 = vsub.f32 %v698, %v771
    %v773 = vand.u32 %v772, 4294901760
    %v774 = vsub.f32 %v772, %v773
    %v775 = vand.u32 %v774, 4294901760
    %776 = vmatmul.mubr.f32.gmra.mxu0 %v775
    %v777 = vpop.f32.mrf.mxu0
    %v778 = vadd.f32 %v694, %v777
    %v779 = vpop.f32.mrf.mxu0
    %780 = vdwg.mxu0
    %781 = vmatprep.subr.mxu0 0.0
    %782 = vmatpush1.msra.mxu0 0.0
    %783 = vmatprep.subr.mxu0 0.0
    %784 = vmatpush1.msra.mxu0 0.0
    %785 = vmatprep.subr.mxu0 0.0
    %786 = vmatpush1.msra.mxu0 0.0
    %787 = vmatprep.subr.mxu0 0.0
    %788 = vmatpush1.msra.mxu0 0.0
    %789 = vmatprep.subr.mxu0 0.0
    %790 = vmatpush1.msra.mxu0 0.0
    %791 = vmatprep.subr.mxu0 0.0
    %792 = vmatpush1.msra.mxu0 0.0
    %793 = vmatprep.subr.mxu0 0.0
    %794 = vmatpush1.msra.mxu0 0.0
    %795 = vmatprep.subr.mxu0 0.0
    %796 = vmatpush1.msra.mxu0 0.0
    %797 = vmatprep.subr.mxu0 0.0
    %798 = vmatpush1.msra.mxu0 0.0
    %799 = vmatprep.subr.mxu0 0.0
    %800 = vmatpush1.msra.mxu0 0.0
    %801 = vmatprep.subr.mxu0 0.0
    %802 = vmatpush1.msra.mxu0 0.0
    %803 = vmatprep.subr.mxu0 0.0
    %804 = vmatpush1.msra.mxu0 0.0
    %805 = vmatprep.subr.mxu0 0.0
    %806 = vmatpush1.msra.mxu0 0.0
    %807 = vmatprep.subr.mxu0 0.0
    %808 = vmatpush1.msra.mxu0 0.0
    %809 = vmatprep.subr.mxu0 0.0
    %v810 = vand.u32 %v702, 4294901760
    %v811 = vsub.f32 %v702, %v810
    %v812 = vand.u32 %v811, 4294901760
    %v813 = vsub.f32 %v811, %v812
    %v814 = vand.u32 %v813, 4294901760
    %815 = vmatpush1.msra.mxu0 %v814
    %816 = vmatprep.subr.mxu0 0.0
    %v817 = vand.u32 %v687, 4294901760
    %v818 = vsub.f32 %v687, %v817
    %v819 = vand.u32 %v818, 4294901760
    %v820 = vsub.f32 %v818, %v819
    %v821 = vand.u32 %v820, 4294901760
    %822 = vmatpush1.msra.mxu0 %v821
    %823 = vmatprep.subr.mxu0 0.0
    %824 = vmatpush2.msra.mxu0 0.0
    %825 = vmatprep.subr.mxu0 0.0
    %826 = vmatpush2.msra.mxu0 0.0
    %827 = vmatprep.subr.mxu0 0.0
    %828 = vmatpush2.msra.mxu0 0.0
    %829 = vmatprep.subr.mxu0 0.0
    %830 = vmatpush2.msra.mxu0 0.0
    %831 = vmatprep.subr.mxu0 0.0
    %832 = vmatpush2.msra.mxu0 0.0
    %833 = vmatprep.subr.mxu0 0.0
    %834 = vmatpush2.msra.mxu0 0.0
    %835 = vmatprep.subr.mxu0 0.0
    %836 = vmatpush2.msra.mxu0 0.0
    %837 = vmatprep.subr.mxu0 0.0
    %838 = vmatpush2.msra.mxu0 0.0
    %839 = vmatprep.subr.mxu0 0.0
    %840 = vmatpush2.msra.mxu0 0.0
    %841 = vmatprep.subr.mxu0 0.0
    %842 = vmatpush2.msra.mxu0 0.0
    %843 = vmatprep.subr.mxu0 0.0
    %844 = vmatpush2.msra.mxu0 0.0
    %845 = vmatprep.subr.mxu0 0.0
    %846 = vmatpush2.msra.mxu0 0.0
    %847 = vmatprep.subr.mxu0 0.0
    %848 = vmatpush2.msra.mxu0 0.0
    %849 = vmatprep.subr.mxu0 0.0
    %850 = vmatpush2.msra.mxu0 0.0
    %851 = vmatprep.subr.mxu0 0.0
    %852 = vmatpush2.msra.mxu0 0.0
    %853 = vmatprep.subr.mxu0 0.0
    %854 = vmatpush2.msra.mxu0 0.0
    %855 = vmatprep.mubr.f32.mxu0 0.0
    %v856 = vand.u32 %v698, 4294901760
    %857 = vmatmul.mubr.f32.gmra.mxu0 %v856
    %v858 = vpop.f32.mrf.mxu0
    %v859 = vadd.f32 %v778, %v858
    %v860 = vpop.f32.mrf.mxu0
    %861 = vdwg.mxu0
    %862 = vmatprep.subr.mxu0 0.0
    %863 = vmatpush1.msra.mxu0 0.0
    %864 = vmatprep.subr.mxu0 0.0
    %865 = vmatpush1.msra.mxu0 0.0
    %866 = vmatprep.subr.mxu0 0.0
    %867 = vmatpush1.msra.mxu0 0.0
    %868 = vmatprep.subr.mxu0 0.0
    %869 = vmatpush1.msra.mxu0 0.0
    %870 = vmatprep.subr.mxu0 0.0
    %871 = vmatpush1.msra.mxu0 0.0
    %872 = vmatprep.subr.mxu0 0.0
    %873 = vmatpush1.msra.mxu0 0.0
    %874 = vmatprep.subr.mxu0 0.0
    %875 = vmatpush1.msra.mxu0 0.0
    %876 = vmatprep.subr.mxu0 0.0
    %877 = vmatpush1.msra.mxu0 0.0
    %878 = vmatprep.subr.mxu0 0.0
    %879 = vmatpush1.msra.mxu0 0.0
    %880 = vmatprep.subr.mxu0 0.0
    %881 = vmatpush1.msra.mxu0 0.0
    %882 = vmatprep.subr.mxu0 0.0
    %883 = vmatpush1.msra.mxu0 0.0
    %884 = vmatprep.subr.mxu0 0.0
    %885 = vmatpush1.msra.mxu0 0.0
    %886 = vmatprep.subr.mxu0 0.0
    %887 = vmatpush1.msra.mxu0 0.0
    %888 = vmatprep.subr.mxu0 0.0
    %889 = vmatpush1.msra.mxu0 0.0
    %890 = vmatprep.subr.mxu0 0.0
    %v891 = vand.u32 %v702, 4294901760
    %v892 = vsub.f32 %v702, %v891
    %893 = vmatpush1.msra.mxu0 %v892
    %894 = vmatprep.subr.mxu0 0.0
    %v895 = vand.u32 %v687, 4294901760
    %v896 = vsub.f32 %v687, %v895
    %897 = vmatpush1.msra.mxu0 %v896
    %898 = vmatprep.subr.mxu0 0.0
    %899 = vmatpush2.msra.mxu0 0.0
    %900 = vmatprep.subr.mxu0 0.0
    %901 = vmatpush2.msra.mxu0 0.0
    %902 = vmatprep.subr.mxu0 0.0
    %903 = vmatpush2.msra.mxu0 0.0
    %904 = vmatprep.subr.mxu0 0.0
    %905 = vmatpush2.msra.mxu0 0.0
    %906 = vmatprep.subr.mxu0 0.0
    %907 = vmatpush2.msra.mxu0 0.0
    %908 = vmatprep.subr.mxu0 0.0
    %909 = vmatpush2.msra.mxu0 0.0
    %910 = vmatprep.subr.mxu0 0.0
    %911 = vmatpush2.msra.mxu0 0.0
    %912 = vmatprep.subr.mxu0 0.0
    %913 = vmatpush2.msra.mxu0 0.0
    %914 = vmatprep.subr.mxu0 0.0
    %915 = vmatpush2.msra.mxu0 0.0
    %916 = vmatprep.subr.mxu0 0.0
    %917 = vmatpush2.msra.mxu0 0.0
    %918 = vmatprep.subr.mxu0 0.0
    %919 = vmatpush2.msra.mxu0 0.0
    %920 = vmatprep.subr.mxu0 0.0
    %921 = vmatpush2.msra.mxu0 0.0
    %922 = vmatprep.subr.mxu0 0.0
    %923 = vmatpush2.msra.mxu0 0.0
    %924 = vmatprep.subr.mxu0 0.0
    %925 = vmatpush2.msra.mxu0 0.0
    %926 = vmatprep.subr.mxu0 0.0
    %927 = vmatpush2.msra.mxu0 0.0
    %928 = vmatprep.subr.mxu0 0.0
    %929 = vmatpush2.msra.mxu0 0.0
    %930 = vmatprep.mubr.f32.mxu0 0.0
    %v931 = vand.u32 %v698, 4294901760
    %v932 = vsub.f32 %v698, %v931
    %933 = vmatmul.mubr.f32.gmra.mxu0 %v932
    %v934 = vpop.f32.mrf.mxu0
    %v935 = vadd.f32 %v859, %v934
    %v936 = vpop.f32.mrf.mxu0
    %937 = vdwg.mxu0
    %938 = vmatprep.subr.mxu0 0.0
    %939 = vmatpush1.msra.mxu0 0.0
    %940 = vmatprep.subr.mxu0 0.0
    %941 = vmatpush1.msra.mxu0 0.0
    %942 = vmatprep.subr.mxu0 0.0
    %943 = vmatpush1.msra.mxu0 0.0
    %944 = vmatprep.subr.mxu0 0.0
    %945 = vmatpush1.msra.mxu0 0.0
    %946 = vmatprep.subr.mxu0 0.0
    %947 = vmatpush1.msra.mxu0 0.0
    %948 = vmatprep.subr.mxu0 0.0
    %949 = vmatpush1.msra.mxu0 0.0
    %950 = vmatprep.subr.mxu0 0.0
    %951 = vmatpush1.msra.mxu0 0.0
    %952 = vmatprep.subr.mxu0 0.0
    %953 = vmatpush1.msra.mxu0 0.0
    %954 = vmatprep.subr.mxu0 0.0
    %955 = vmatpush1.msra.mxu0 0.0
    %956 = vmatprep.subr.mxu0 0.0
    %957 = vmatpush1.msra.mxu0 0.0
    %958 = vmatprep.subr.mxu0 0.0
    %959 = vmatpush1.msra.mxu0 0.0
    %960 = vmatprep.subr.mxu0 0.0
    %961 = vmatpush1.msra.mxu0 0.0
    %962 = vmatprep.subr.mxu0 0.0
    %963 = vmatpush1.msra.mxu0 0.0
    %964 = vmatprep.subr.mxu0 0.0
    %965 = vmatpush1.msra.mxu0 0.0
    %966 = vmatprep.subr.mxu0 0.0
    %v967 = vand.u32 %v702, 4294901760
    %968 = vmatpush1.msra.mxu0 %v967
    %969 = vmatprep.subr.mxu0 0.0
    %v970 = vand.u32 %v687, 4294901760
    %971 = vmatpush1.msra.mxu0 %v970
    %972 = vmatprep.subr.mxu0 0.0
    %973 = vmatpush2.msra.mxu0 0.0
    %974 = vmatprep.subr.mxu0 0.0
    %975 = vmatpush2.msra.mxu0 0.0
    %976 = vmatprep.subr.mxu0 0.0
    %977 = vmatpush2.msra.mxu0 0.0
    %978 = vmatprep.subr.mxu0 0.0
    %979 = vmatpush2.msra.mxu0 0.0
    %980 = vmatprep.subr.mxu0 0.0
    %981 = vmatpush2.msra.mxu0 0.0
    %982 = vmatprep.subr.mxu0 0.0
    %983 = vmatpush2.msra.mxu0 0.0
    %984 = vmatprep.subr.mxu0 0.0
    %985 = vmatpush2.msra.mxu0 0.0
    %986 = vmatprep.subr.mxu0 0.0
    %987 = vmatpush2.msra.mxu0 0.0
    %988 = vmatprep.subr.mxu0 0.0
    %989 = vmatpush2.msra.mxu0 0.0
    %990 = vmatprep.subr.mxu0 0.0
    %991 = vmatpush2.msra.mxu0 0.0
    %992 = vmatprep.subr.mxu0 0.0
    %993 = vmatpush2.msra.mxu0 0.0
    %994 = vmatprep.subr.mxu0 0.0
    %995 = vmatpush2.msra.mxu0 0.0
    %996 = vmatprep.subr.mxu0 0.0
    %997 = vmatpush2.msra.mxu0 0.0
    %998 = vmatprep.subr.mxu0 0.0
    %999 = vmatpush2.msra.mxu0 0.0
    %1000 = vmatprep.subr.mxu0 0.0
    %1001 = vmatpush2.msra.mxu0 0.0
    %1002 = vmatprep.subr.mxu0 0.0
    %1003 = vmatpush2.msra.mxu0 0.0
    %1004 = vmatprep.mubr.f32.mxu0 0.0
    %v1005 = vand.u32 %v698, 4294901760
    %v1006 = vsub.f32 %v698, %v1005
    %v1007 = vand.u32 %v1006, 4294901760
    %1008 = vmatmul.mubr.f32.gmra.mxu0 %v1007
    %v1009 = vpop.f32.mrf.mxu0
    %v1010 = vadd.f32 %v935, %v1009
    %v1011 = vpop.f32.mrf.mxu0
    %1012 = vdwg.mxu0
    %1013 = vmatprep.subr.mxu0 0.0
    %1014 = vmatpush1.msra.mxu0 0.0
    %1015 = vmatprep.subr.mxu0 0.0
    %1016 = vmatpush1.msra.mxu0 0.0
    %1017 = vmatprep.subr.mxu0 0.0
    %1018 = vmatpush1.msra.mxu0 0.0
    %1019 = vmatprep.subr.mxu0 0.0
    %1020 = vmatpush1.msra.mxu0 0.0
    %1021 = vmatprep.subr.mxu0 0.0
    %1022 = vmatpush1.msra.mxu0 0.0
    %1023 = vmatprep.subr.mxu0 0.0
    %1024 = vmatpush1.msra.mxu0 0.0
    %1025 = vmatprep.subr.mxu0 0.0
    %1026 = vmatpush1.msra.mxu0 0.0
    %1027 = vmatprep.subr.mxu0 0.0
    %1028 = vmatpush1.msra.mxu0 0.0
    %1029 = vmatprep.subr.mxu0 0.0
    %1030 = vmatpush1.msra.mxu0 0.0
    %1031 = vmatprep.subr.mxu0 0.0
    %1032 = vmatpush1.msra.mxu0 0.0
    %1033 = vmatprep.subr.mxu0 0.0
    %1034 = vmatpush1.msra.mxu0 0.0
    %1035 = vmatprep.subr.mxu0 0.0
    %1036 = vmatpush1.msra.mxu0 0.0
    %1037 = vmatprep.subr.mxu0 0.0
    %1038 = vmatpush1.msra.mxu0 0.0
    %1039 = vmatprep.subr.mxu0 0.0
    %1040 = vmatpush1.msra.mxu0 0.0
    %1041 = vmatprep.subr.mxu0 0.0
    %v1042 = vand.u32 %v702, 4294901760
    %v1043 = vsub.f32 %v702, %v1042
    %v1044 = vand.u32 %v1043, 4294901760
    %1045 = vmatpush1.msra.mxu0 %v1044
    %1046 = vmatprep.subr.mxu0 0.0
    %v1047 = vand.u32 %v687, 4294901760
    %v1048 = vsub.f32 %v687, %v1047
    %v1049 = vand.u32 %v1048, 4294901760
    %1050 = vmatpush1.msra.mxu0 %v1049
    %1051 = vmatprep.subr.mxu0 0.0
    %1052 = vmatpush2.msra.mxu0 0.0
    %1053 = vmatprep.subr.mxu0 0.0
    %1054 = vmatpush2.msra.mxu0 0.0
    %1055 = vmatprep.subr.mxu0 0.0
    %1056 = vmatpush2.msra.mxu0 0.0
    %1057 = vmatprep.subr.mxu0 0.0
    %1058 = vmatpush2.msra.mxu0 0.0
    %1059 = vmatprep.subr.mxu0 0.0
    %1060 = vmatpush2.msra.mxu0 0.0
    %1061 = vmatprep.subr.mxu0 0.0
    %1062 = vmatpush2.msra.mxu0 0.0
    %1063 = vmatprep.subr.mxu0 0.0
    %1064 = vmatpush2.msra.mxu0 0.0
    %1065 = vmatprep.subr.mxu0 0.0
    %1066 = vmatpush2.msra.mxu0 0.0
    %1067 = vmatprep.subr.mxu0 0.0
    %1068 = vmatpush2.msra.mxu0 0.0
    %1069 = vmatprep.subr.mxu0 0.0
    %1070 = vmatpush2.msra.mxu0 0.0
    %1071 = vmatprep.subr.mxu0 0.0
    %1072 = vmatpush2.msra.mxu0 0.0
    %1073 = vmatprep.subr.mxu0 0.0
    %1074 = vmatpush2.msra.mxu0 0.0
    %1075 = vmatprep.subr.mxu0 0.0
    %1076 = vmatpush2.msra.mxu0 0.0
    %1077 = vmatprep.subr.mxu0 0.0
    %1078 = vmatpush2.msra.mxu0 0.0
    %1079 = vmatprep.subr.mxu0 0.0
    %1080 = vmatpush2.msra.mxu0 0.0
    %1081 = vmatprep.subr.mxu0 0.0
    %1082 = vmatpush2.msra.mxu0 0.0
    %1083 = vmatprep.mubr.f32.mxu0 0.0
    %v1084 = vand.u32 %v698, 4294901760
    %1085 = vmatmul.mubr.f32.gmra.mxu0 %v1084
    %v1086 = vpop.f32.mrf.mxu0
    %v1087 = vadd.f32 %v1010, %v1086
    %v1088 = vpop.f32.mrf.mxu0
    %1089 = vdwg.mxu0
    %1090 = vmatprep.subr.mxu0 0.0
    %1091 = vmatpush1.msra.mxu0 0.0
    %1092 = vmatprep.subr.mxu0 0.0
    %1093 = vmatpush1.msra.mxu0 0.0
    %1094 = vmatprep.subr.mxu0 0.0
    %1095 = vmatpush1.msra.mxu0 0.0
    %1096 = vmatprep.subr.mxu0 0.0
    %1097 = vmatpush1.msra.mxu0 0.0
    %1098 = vmatprep.subr.mxu0 0.0
    %1099 = vmatpush1.msra.mxu0 0.0
    %1100 = vmatprep.subr.mxu0 0.0
    %1101 = vmatpush1.msra.mxu0 0.0
    %1102 = vmatprep.subr.mxu0 0.0
    %1103 = vmatpush1.msra.mxu0 0.0
    %1104 = vmatprep.subr.mxu0 0.0
    %1105 = vmatpush1.msra.mxu0 0.0
    %1106 = vmatprep.subr.mxu0 0.0
    %1107 = vmatpush1.msra.mxu0 0.0
    %1108 = vmatprep.subr.mxu0 0.0
    %1109 = vmatpush1.msra.mxu0 0.0
    %1110 = vmatprep.subr.mxu0 0.0
    %1111 = vmatpush1.msra.mxu0 0.0
    %1112 = vmatprep.subr.mxu0 0.0
    %1113 = vmatpush1.msra.mxu0 0.0
    %1114 = vmatprep.subr.mxu0 0.0
    %1115 = vmatpush1.msra.mxu0 0.0
    %1116 = vmatprep.subr.mxu0 0.0
    %1117 = vmatpush1.msra.mxu0 0.0
    %1118 = vmatprep.subr.mxu0 0.0
    %v1119 = vand.u32 %v702, 4294901760
    %1120 = vmatpush1.msra.mxu0 %v1119
    %1121 = vmatprep.subr.mxu0 0.0
    %v1122 = vand.u32 %v687, 4294901760
    %1123 = vmatpush1.msra.mxu0 %v1122
    %1124 = vmatprep.subr.mxu0 0.0
    %1125 = vmatpush2.msra.mxu0 0.0
    %1126 = vmatprep.subr.mxu0 0.0
    %1127 = vmatpush2.msra.mxu0 0.0
    %1128 = vmatprep.subr.mxu0 0.0
    %1129 = vmatpush2.msra.mxu0 0.0
    %1130 = vmatprep.subr.mxu0 0.0
    %1131 = vmatpush2.msra.mxu0 0.0
    %1132 = vmatprep.subr.mxu0 0.0
    %1133 = vmatpush2.msra.mxu0 0.0
    %1134 = vmatprep.subr.mxu0 0.0
    %1135 = vmatpush2.msra.mxu0 0.0
    %1136 = vmatprep.subr.mxu0 0.0
    %1137 = vmatpush2.msra.mxu0 0.0
    %1138 = vmatprep.subr.mxu0 0.0
    %1139 = vmatpush2.msra.mxu0 0.0
    %1140 = vmatprep.subr.mxu0 0.0
    %1141 = vmatpush2.msra.mxu0 0.0
    %1142 = vmatprep.subr.mxu0 0.0
    %1143 = vmatpush2.msra.mxu0 0.0
    %1144 = vmatprep.subr.mxu0 0.0
    %1145 = vmatpush2.msra.mxu0 0.0
    %1146 = vmatprep.subr.mxu0 0.0
    %1147 = vmatpush2.msra.mxu0 0.0
    %1148 = vmatprep.subr.mxu0 0.0
    %1149 = vmatpush2.msra.mxu0 0.0
    %1150 = vmatprep.subr.mxu0 0.0
    %1151 = vmatpush2.msra.mxu0 0.0
    %1152 = vmatprep.subr.mxu0 0.0
    %1153 = vmatpush2.msra.mxu0 0.0
    %1154 = vmatprep.subr.mxu0 0.0
    %1155 = vmatpush2.msra.mxu0 0.0
    %1156 = vmatprep.mubr.f32.mxu0 0.0
    %v1157 = vand.u32 %v698, 4294901760
    %1158 = vmatmul.mubr.f32.gmra.mxu0 %v1157
    %v1159 = vpop.f32.mrf.mxu0
    %v1160 = vadd.f32 %v1087, %v1159
    %v1161 = vpop.f32.mrf.mxu0
    %1162 = vdwg.mxu0
    %1163 = vmax.xlane.f32.xlu0 %v1160
    %v1164 = vpop.xlane.xlu0 %1163
    %v1165 = vsub.f32 %v1160, %v1164
    %v1166 = vmul.f32 %v1165, 1.442695
    %v1167 = vpow.pop %v1166
    %1168 = vadd.xlane.f32.xlu0 %v1167
    %v1169 = vpop.xlane.xlu0 %1168
    %v1170 = vrcp.pop %v1169
    %v1171 = vmul.f32 %v1167, %v1170
    %1172 = vst.msk [vmem:[#allocation2] sm:$0xff] %vm696, %v1171
    // Predicated region
    $region22: #{tpu_custom_call.1} parent=1 // pred_check
      _
    $region23: #{tpu_custom_call.1} parent=1 // pred_check_branch
      %1174 = sbr.rel (0) target = $region25
    $region24: #{tpu_custom_call.1} parent=1 // pred_region
      %s1176 = ssub.s32 128, 128
      %1177 = vsyncadd [#allocation3], %s1176
      %s1179 = sshll.u32 [#allocation2], 4
      %s1180 = int_to_ptr.vmem [resolvable:$true] %s1179
      %1182 = dma.vmem_to_hbm [thread:$0]  %s1180, 128, %s5, [#allocation3]
    $region25: #{tpu_custom_call.1} parent=1 // pred_fallthru
      _
    // Predicated region
    $region26: #{tpu_custom_call.1} parent=1 // pred_check
      _
    $region27: #{tpu_custom_call.1} parent=1 // pred_check_branch
      %1184 = sbr.rel (0) target = $region29
    $region28: #{tpu_custom_call.1} parent=1 // pred_region
      %1185 = dma.done [#allocation3], 128
    $region29: #{tpu_custom_call.1} parent=1 // pred_fallthru
      _
    %1186 = vsyncpa [#allocation3], 1

</llo_original>
